<compile_context>
chip_gen: v6e
topology: v6e:2x2x1
jax: 0.10.0
libtpu: 0.0.40
codegen_flags: <defaults>
</compile_context>

<pallas_src>
import functools

import jax
import jax.numpy as jnp
from jax.experimental import pallas as pl
from jax.experimental.pallas import tpu as pltpu

C_PAD = 128                    # lane-dense channel padding (one vreg of lanes)
COMPUTE_DTYPE = jnp.bfloat16   # MXU operand dtype; accumulation stays f32
BN_EPS = 1e-5                  # torch BatchNorm1d default


# ------------------------------ Pallas kernel -------------------------------

def _stem_kernel(x_ref, w1_ref, w2a_ref, w2b_ref, w3a_ref, w3b_ref,
                 g_ref, b_ref, o_ref, *, eps, rows2, c_stem, l2):
    f32 = jnp.float32

    def mm(a, w_ref_):
        # bf16 operands on the MXU, f32 accumulation.
        return jnp.dot(a.astype(COMPUTE_DTYPE), w_ref_[...],
                       preferred_element_type=f32)

    g = g_ref[...]                                   # (4, C_PAD) f32
    b = b_ref[...]                                   # (4, C_PAD) f32

    def bn_relu(acc, layer):
        # BatchNorm1d training-mode forward (biased var), folded to a single
        # per-channel scale/bias, then ReLU.  Stats via one sum/sumsq pass.
        inv_m = 1.0 / acc.shape[0]
        mean = jnp.sum(acc, axis=0, keepdims=True) * inv_m
        var = jnp.sum(acc * acc, axis=0, keepdims=True) * inv_m - mean * mean
        scale = g[layer:layer + 1, :] * jax.lax.rsqrt(var + eps)
        bias = b[layer:layer + 1, :] - mean * scale
        return jnp.maximum(acc * scale + bias, 0.0)

    # ---- stem1: Conv1d(k=3, s=2, p=1) == ONE tap-stacked matmul (K=3*C_in) --
    # rows of h1 are ordered (parity, n, l2): even half first, odd half second.
    h1 = bn_relu(mm(x_ref[...], w1_ref), 0)               # (2*rows2, C_PAD)

    # ---- branch1: MaxPool1d(2, 2) == f32 max of the even/odd halves ---------
    pool1 = jnp.maximum(h1[:rows2, :], h1[rows2:, :])      # (rows2, C_PAD)

    # ---- stem2a: 1x1 conv == channel matmul ----------------------------------
    h2a = bn_relu(mm(h1, w2a_ref), 1)                      # (2*rows2, C_PAD)

    # ---- stem2b: Conv1d(k=3, s=2, p=1), tap-fused into ONE matmul ------------
    even = h2a[:rows2, :]                                  # tap @ position 2*l2
    odd = h2a[rows2:, :]                                   # tap @ position 2*l2+1
    # tap @ 2*l2-1 == odd shifted down one row inside each sample; the first
    # position of every sample reads the conv zero-padding.
    row = jax.lax.broadcasted_iota(jnp.int32, (rows2, C_PAD), 0)
    prev = jnp.where(row % l2 != 0, pltpu.roll(odd, shift=1, axis=0), 0.0)
    # Pack the 3 taps into lanes [0:3*c_stem) of one slab; h2a's padded lanes
    # are exactly zero, so two lane-rolls + adds give a clean K=3*c_stem LHS.
    taps = (prev
            + pltpu.roll(even, shift=c_stem, axis=1)
            + pltpu.roll(odd, shift=2 * c_stem, axis=1))
    h2b = bn_relu(mm(taps, w2b_ref), 2)                    # (rows2, C_PAD)

    # ---- concat(channels) + stem3 1x1 conv == split-weight sum --------------
    acc3 = mm(pool1, w3a_ref) + mm(h2b, w3b_ref)
    o_ref[...] = bn_relu(acc3, 3).astype(o_ref.dtype)      # lane-dense bf16


# ------------------------------- JAX wrapper ---------------------------------

def _full_spec(a):
    return pl.BlockSpec(a.shape, lambda i, _nd=a.ndim: (0,) * _nd)


def stem_block(x, packed, *, num_init_features):
    """x: (N, C_in, L) NCL (like the torch module). Returns (N, F, L // 4)."""
    n, c_in, l = x.shape
    assert l % 4 == 0, "L must be divisible by 4 (two stride-2 stages)"
    l2 = l // 4
    rows2 = n * l2
    c_stem = num_init_features // 2
    assert 3 * c_stem <= C_PAD, "lane-packed stem2b taps need 3*C_stem <= 128"

    # ---- layout glue: NCL -> channels-last tap-stacked stem1 input ----------
    x_cl = jnp.transpose(x, (0, 2, 1))                           # (N, L, C_in)
    prev = jnp.pad(x_cl[:, :-1, :], ((0, 0), (1, 0), (0, 0)))[:, 0::2, :]
    cent = x_cl[:, 0::2, :]
    nxt = x_cl[:, 1::2, :]
    taps = jnp.concatenate([prev, cent, nxt], axis=-1)           # (N, L1, 3*C_in)
    # rows -> (parity, n, l2): even/odd stem1 outputs become static slices.
    taps = taps.reshape(n, l2, 2, 3 * c_in).transpose(2, 0, 1, 3)
    taps = taps.reshape(2 * rows2, 3 * c_in)
    k1p = packed["w1"].shape[0]
    x_taps = jnp.pad(taps, ((0, 0), (0, k1p - 3 * c_in))).astype(COMPUTE_DTYPE)

    operands = (x_taps, packed["w1"], packed["w2a"], packed["w2b"],
                packed["w3a"], packed["w3b"], packed["g"], packed["b"])

    out2d = pl.pallas_call(
        functools.partial(_stem_kernel, eps=BN_EPS, rows2=rows2,
                          c_stem=c_stem, l2=l2),
        out_shape=jax.ShapeDtypeStruct((rows2, C_PAD), COMPUTE_DTYPE),
        grid=(1,),
        in_specs=[_full_spec(a) for a in operands],
        out_specs=pl.BlockSpec((rows2, C_PAD), lambda i: (0, 0)),
        compiler_params=pltpu.CompilerParams(
            dimension_semantics=("arbitrary",)),
    )(*operands)

    # lane-dense bf16 slab -> module's (N, F, L//4) NCL interface.
    out = out2d[:, :num_init_features].astype(jnp.float32)
    return jnp.transpose(out.reshape(n, l2, num_init_features), (0, 2, 1))


# ---------------------------- parameter handling -----------------------------

def init_params(key, num_input_channels, num_init_features):
    """Torch-layout params: Conv1d weight (C_out, C_in, k), BN gamma/beta."""
    num_stem_features = num_init_features // 2

    def layer(k, ci, co, ksz):
        kw, kg, kb = jax.random.split(k, 3)
        return dict(
            w=jax.random.normal(kw, (co, ci, ksz), jnp.float32) * 0.1,
            gamma=1.0 + 0.2 * jax.random.normal(kg, (co,), jnp.float32),
            beta=0.2 * jax.random.normal(kb, (co,), jnp.float32))

    k1, k2, k3, k4 = jax.random.split(key, 4)
    return dict(
        stem1=layer(k1, num_input_channels, num_init_features, 3),
        stem2a=layer(k2, num_init_features, num_stem_features, 1),
        stem2b=layer(k3, num_stem_features, num_init_features, 3),
        stem3=layer(k4, 2 * num_init_features, num_init_features, 1))


def pack_params(params):
    """Torch-layout params -> kernel-ready tap-stacked, lane-padded bf16."""
    def pad2(w, rows, cols):
        return jnp.pad(w, ((0, rows - w.shape[0]), (0, cols - w.shape[1])))

    # stem1: (F, C_in, 3) -> tap-stacked (3*C_in, F); tap order (l-1, l, l+1).
    w1 = params["stem1"]["w"]
    f, c_in, _ = w1.shape
    k1 = 3 * c_in
    k1p = ((k1 + 7) // 8) * 8
    w1s = pad2(jnp.transpose(w1, (2, 1, 0)).reshape(k1, f), k1p, C_PAD)

    # stem2a: 1x1 conv (F -> F/2).
    w2a = pad2(params["stem2a"]["w"][:, :, 0].T, C_PAD, C_PAD)

    # stem2b: (F, F/2, 3) -> tap-stacked (3*F/2, F); K rows match the
    # in-kernel lane packing [prev | center | next].
    w2b = params["stem2b"]["w"]
    cs = w2b.shape[1]
    assert 3 * cs <= C_PAD
    w2bs = pad2(jnp.transpose(w2b, (2, 1, 0)).reshape(3 * cs, f), C_PAD, C_PAD)

    # stem3: 1x1 conv over cat([branch1, branch2]); split along input channels
    # so no in-kernel concatenation is needed.
    w3 = params["stem3"]["w"][:, :, 0].T                         # (2F, F)
    w3a = pad2(w3[:f], C_PAD, C_PAD)
    w3b = pad2(w3[f:], C_PAD, C_PAD)

    def pad_vec(v):
        return jnp.pad(v, (0, C_PAD - v.shape[0]))

    order = ("stem1", "stem2a", "stem2b", "stem3")
    g = jnp.stack([pad_vec(params[k]["gamma"]) for k in order]).astype(jnp.float32)
    b = jnp.stack([pad_vec(params[k]["beta"]) for k in order]).astype(jnp.float32)

    cd = COMPUTE_DTYPE
    return dict(w1=w1s.astype(cd), w2a=w2a.astype(cd), w2b=w2bs.astype(cd),
                w3a=w3a.astype(cd), w3b=w3b.astype(cd), g=g, b=b)


# --------------------------- pure-JAX reference -------------------------------

def stem_reference(x, params, eps=BN_EPS):
    """f32 reference mirroring the torch forward (training-mode BatchNorm)."""
    def conv(y, w, stride, pad):
        return jax.lax.conv_general_dilated(
            y, w, window_strides=(stride,), padding=((pad, pad),))

    def bn_relu(y, p):
        mean = jnp.mean(y, axis=(0, 2), keepdims=True)
        var = jnp.mean((y - mean) ** 2, axis=(0, 2), keepdims=True)
        yh = (y - mean) * jax.lax.rsqrt(var + eps)
        yh = yh * p["gamma"][None, :, None] + p["beta"][None, :, None]
        return jnp.maximum(yh, 0.0)

    h1 = bn_relu(conv(x, params["stem1"]["w"], 2, 1), params["stem1"])
    b2 = bn_relu(conv(h1, params["stem2a"]["w"], 1, 0), params["stem2a"])
    b2 = bn_relu(conv(b2, params["stem2b"]["w"], 2, 1), params["stem2b"])
    n, c, l1 = h1.shape
    b1 = jnp.max(h1.reshape(n, c, l1 // 2, 2), axis=-1)
    cat = jnp.concatenate([b1, b2], axis=1)
    return bn_relu(conv(cat, params["stem3"]["w"], 1, 0), params["stem3"])


# ----------------------------------- main ------------------------------------

if __name__ == "__main__":
    key = jax.random.PRNGKey(0)
    kx, kp = jax.random.split(key)

    N, C_IN, L = 2, 4, 16
    NUM_INIT_FEATURES = 32

    x = jax.random.normal(kx, (N, C_IN, L), jnp.float32)   # NCL, like torch Conv1d
    params = init_params(kp, C_IN, NUM_INIT_FEATURES)
    packed = pack_params(params)

    fn = jax.jit(stem_block, static_argnames=("num_init_features",))
    out = jax.block_until_ready(fn(x, packed, num_init_features=NUM_INIT_FEATURES))

    assert out.shape == (N, NUM_INIT_FEATURES, L // 4), out.shape
    assert bool(jnp.all(jnp.isfinite(out)))

    ref = stem_reference(x, params)
    err = float(jnp.max(jnp.abs(out - ref)))
    assert err < 0.25, f"max|kernel - reference| = {err}"   # bf16-MXU tolerance
    print("KERNEL_OK")
</pallas_src>

<mosaic_0001>
module attributes {stable_mosaic.version = 11 : i64} {
  func.func @_stem_kernel(%arg0: i32, %arg1: memref<16x16xbf16, #tpu.memory_space<vmem>>, %arg2: memref<16x128xbf16, #tpu.memory_space<vmem>>, %arg3: memref<128x128xbf16, #tpu.memory_space<vmem>>, %arg4: memref<128x128xbf16, #tpu.memory_space<vmem>>, %arg5: memref<128x128xbf16, #tpu.memory_space<vmem>>, %arg6: memref<128x128xbf16, #tpu.memory_space<vmem>>, %arg7: memref<4x128xf32, #tpu.memory_space<vmem>>, %arg8: memref<4x128xf32, #tpu.memory_space<vmem>>, %arg9: memref<8x128xbf16, #tpu.memory_space<vmem>>) attributes {dimension_semantics = [#tpu.dimension_semantics<arbitrary>], iteration_bounds = array<i64: 1>, scalar_prefetch = 0 : i64, scratch_operands = 0 : i64, tpu.core_type = #tpu.core_type<tc>, window_params = [{pipeline_mode = #tpu.pipeline_mode<synchronous>, transform_indices = @transform_0, window_bounds = array<i64: 16, 16>}, {pipeline_mode = #tpu.pipeline_mode<synchronous>, transform_indices = @transform_1, window_bounds = array<i64: 16, 128>}, {pipeline_mode = #tpu.pipeline_mode<synchronous>, transform_indices = @transform_2, window_bounds = array<i64: 128, 128>}, {pipeline_mode = #tpu.pipeline_mode<synchronous>, transform_indices = @transform_3, window_bounds = array<i64: 128, 128>}, {pipeline_mode = #tpu.pipeline_mode<synchronous>, transform_indices = @transform_4, window_bounds = array<i64: 128, 128>}, {pipeline_mode = #tpu.pipeline_mode<synchronous>, transform_indices = @transform_5, window_bounds = array<i64: 128, 128>}, {pipeline_mode = #tpu.pipeline_mode<synchronous>, transform_indices = @transform_6, window_bounds = array<i64: 4, 128>}, {pipeline_mode = #tpu.pipeline_mode<synchronous>, transform_indices = @transform_7, window_bounds = array<i64: 4, 128>}, {pipeline_mode = #tpu.pipeline_mode<synchronous>, transform_indices = @transform_8, window_bounds = array<i64: 8, 128>}]} {
    %c0 = arith.constant 0 : index
    %c0_0 = arith.constant 0 : index
    %0 = vector.load %arg7[%c0, %c0_0] : memref<4x128xf32, #tpu.memory_space<vmem>>, vector<4x128xf32>
    %c0_1 = arith.constant 0 : index
    %c0_2 = arith.constant 0 : index
    %1 = vector.load %arg8[%c0_1, %c0_2] : memref<4x128xf32, #tpu.memory_space<vmem>>, vector<4x128xf32>
    %c0_3 = arith.constant 0 : index
    %c0_4 = arith.constant 0 : index
    %2 = vector.load %arg1[%c0_3, %c0_4] : memref<16x16xbf16, #tpu.memory_space<vmem>>, vector<16x16xbf16>
    %c0_5 = arith.constant 0 : index
    %c0_6 = arith.constant 0 : index
    %3 = vector.load %arg2[%c0_5, %c0_6] : memref<16x128xbf16, #tpu.memory_space<vmem>>, vector<16x128xbf16>
    %cst = arith.constant dense<0.000000e+00> : vector<16x128xf32>
    %4 = tpu.matmul %2, %3, %cst {dimension_numbers = #tpu.dot_dimension_numbers<[1], [0], [0], [1], [0, 0, 1, 1], [], []>} : vector<16x16xbf16>, vector<16x128xbf16>, vector<16x128xf32> -> vector<16x128xf32>
    %cst_7 = arith.constant dense<0.000000e+00> : vector<128xf32>
    %5 = vector.multi_reduction <add>, %4, %cst_7 [0] : vector<16x128xf32> to vector<128xf32>
    %6 = vector.shape_cast %5 : vector<128xf32> to vector<1x128xf32>
    %cst_8 = arith.constant 6.250000e-02 : f32
    %7 = vector.broadcast %cst_8 : f32 to vector<1x128xf32>
    %8 = arith.mulf %6, %7 : vector<1x128xf32>
    %9 = arith.mulf %4, %4 : vector<16x128xf32>
    %cst_9 = arith.constant dense<0.000000e+00> : vector<128xf32>
    %10 = vector.multi_reduction <add>, %9, %cst_9 [0] : vector<16x128xf32> to vector<128xf32>
    %11 = vector.shape_cast %10 : vector<128xf32> to vector<1x128xf32>
    %cst_10 = arith.constant 6.250000e-02 : f32
    %12 = vector.broadcast %cst_10 : f32 to vector<1x128xf32>
    %13 = arith.mulf %11, %12 : vector<1x128xf32>
    %14 = arith.mulf %8, %8 : vector<1x128xf32>
    %15 = arith.subf %13, %14 : vector<1x128xf32>
    %16 = vector.extract_strided_slice %0 {offsets = [0, 0], sizes = [1, 128], strides = [1, 1]} : vector<4x128xf32> to vector<1x128xf32>
    %cst_11 = arith.constant 9.99999974E-6 : f32
    %17 = vector.broadcast %cst_11 : f32 to vector<1x128xf32>
    %18 = arith.addf %15, %17 : vector<1x128xf32>
    %19 = math.rsqrt %18 : vector<1x128xf32>
    %20 = arith.mulf %16, %19 : vector<1x128xf32>
    %21 = vector.extract_strided_slice %1 {offsets = [0, 0], sizes = [1, 128], strides = [1, 1]} : vector<4x128xf32> to vector<1x128xf32>
    %22 = arith.mulf %8, %20 : vector<1x128xf32>
    %23 = arith.subf %21, %22 : vector<1x128xf32>
    %24 = vector.broadcast %20 : vector<1x128xf32> to vector<16x128xf32>
    %25 = arith.mulf %4, %24 : vector<16x128xf32>
    %26 = vector.broadcast %23 : vector<1x128xf32> to vector<16x128xf32>
    %27 = arith.addf %25, %26 : vector<16x128xf32>
    %cst_12 = arith.constant 0.000000e+00 : f32
    %28 = vector.broadcast %cst_12 : f32 to vector<16x128xf32>
    %29 = arith.maximumf %27, %28 : vector<16x128xf32>
    %30 = vector.extract_strided_slice %29 {offsets = [0, 0], sizes = [8, 128], strides = [1, 1]} : vector<16x128xf32> to vector<8x128xf32>
    %31 = vector.extract_strided_slice %29 {offsets = [8, 0], sizes = [8, 128], strides = [1, 1]} : vector<16x128xf32> to vector<8x128xf32>
    %32 = arith.maximumf %30, %31 : vector<8x128xf32>
    %33 = arith.truncf %29 : vector<16x128xf32> to vector<16x128xbf16>
    %c0_13 = arith.constant 0 : index
    %c0_14 = arith.constant 0 : index
    %34 = vector.load %arg3[%c0_13, %c0_14] : memref<128x128xbf16, #tpu.memory_space<vmem>>, vector<128x128xbf16>
    %cst_15 = arith.constant dense<0.000000e+00> : vector<16x128xf32>
    %35 = tpu.matmul %33, %34, %cst_15 {dimension_numbers = #tpu.dot_dimension_numbers<[1], [0], [0], [1], [0, 0, 1, 1], [], []>} : vector<16x128xbf16>, vector<128x128xbf16>, vector<16x128xf32> -> vector<16x128xf32>
    %cst_16 = arith.constant dense<0.000000e+00> : vector<128xf32>
    %36 = vector.multi_reduction <add>, %35, %cst_16 [0] : vector<16x128xf32> to vector<128xf32>
    %37 = vector.shape_cast %36 : vector<128xf32> to vector<1x128xf32>
    %cst_17 = arith.constant 6.250000e-02 : f32
    %38 = vector.broadcast %cst_17 : f32 to vector<1x128xf32>
    %39 = arith.mulf %37, %38 : vector<1x128xf32>
    %40 = arith.mulf %35, %35 : vector<16x128xf32>
    %cst_18 = arith.constant dense<0.000000e+00> : vector<128xf32>
    %41 = vector.multi_reduction <add>, %40, %cst_18 [0] : vector<16x128xf32> to vector<128xf32>
    %42 = vector.shape_cast %41 : vector<128xf32> to vector<1x128xf32>
    %cst_19 = arith.constant 6.250000e-02 : f32
    %43 = vector.broadcast %cst_19 : f32 to vector<1x128xf32>
    %44 = arith.mulf %42, %43 : vector<1x128xf32>
    %45 = arith.mulf %39, %39 : vector<1x128xf32>
    %46 = arith.subf %44, %45 : vector<1x128xf32>
    %47 = vector.extract_strided_slice %0 {offsets = [1, 0], sizes = [1, 128], strides = [1, 1]} : vector<4x128xf32> to vector<1x128xf32>
    %cst_20 = arith.constant 9.99999974E-6 : f32
    %48 = vector.broadcast %cst_20 : f32 to vector<1x128xf32>
    %49 = arith.addf %46, %48 : vector<1x128xf32>
    %50 = math.rsqrt %49 : vector<1x128xf32>
    %51 = arith.mulf %47, %50 : vector<1x128xf32>
    %52 = vector.extract_strided_slice %1 {offsets = [1, 0], sizes = [1, 128], strides = [1, 1]} : vector<4x128xf32> to vector<1x128xf32>
    %53 = arith.mulf %39, %51 : vector<1x128xf32>
    %54 = arith.subf %52, %53 : vector<1x128xf32>
    %55 = vector.broadcast %51 : vector<1x128xf32> to vector<16x128xf32>
    %56 = arith.mulf %35, %55 : vector<16x128xf32>
    %57 = vector.broadcast %54 : vector<1x128xf32> to vector<16x128xf32>
    %58 = arith.addf %56, %57 : vector<16x128xf32>
    %cst_21 = arith.constant 0.000000e+00 : f32
    %59 = vector.broadcast %cst_21 : f32 to vector<16x128xf32>
    %60 = arith.maximumf %58, %59 : vector<16x128xf32>
    %61 = vector.extract_strided_slice %60 {offsets = [0, 0], sizes = [8, 128], strides = [1, 1]} : vector<16x128xf32> to vector<8x128xf32>
    %62 = vector.extract_strided_slice %60 {offsets = [8, 0], sizes = [8, 128], strides = [1, 1]} : vector<16x128xf32> to vector<8x128xf32>
    %63 = tpu.iota {dimensions = array<i32: 0>} : vector<8x128xi32>
    %c4_i32 = arith.constant 4 : i32
    %c0_i32 = arith.constant 0 : i32
    %64 = arith.cmpi eq, %c4_i32, %c0_i32 : i32
    %c1_i32 = arith.constant 1 : i32
    %65 = arith.select %64, %c1_i32, %c4_i32 : i32
    %66 = vector.broadcast %65 : i32 to vector<8x128xi32>
    %67 = arith.remsi %63, %66 : vector<8x128xi32>
    %c0_i32_22 = arith.constant 0 : i32
    %68 = vector.broadcast %c0_i32_22 : i32 to vector<8x128xi32>
    %69 = arith.cmpi ne, %67, %68 : vector<8x128xi32>
    %c0_i32_23 = arith.constant 0 : i32
    %70 = vector.broadcast %c0_i32_23 : i32 to vector<8x128xi32>
    %71 = arith.cmpi slt, %67, %70 : vector<8x128xi32>
    %c0_i32_24 = arith.constant 0 : i32
    %72 = arith.cmpi slt, %65, %c0_i32_24 : i32
    %73 = vector.broadcast %72 : i1 to vector<8x128xi1>
    %74 = vector.broadcast %73 : vector<8x128xi1> to vector<8x128xi1>
    %75 = arith.xori %71, %74 : vector<8x128xi1>
    %76 = arith.andi %75, %69 : vector<8x128xi1>
    %77 = vector.broadcast %65 : i32 to vector<8x128xi32>
    %78 = arith.addi %67, %77 : vector<8x128xi32>
    %79 = arith.select %76, %78, %67 : vector<8x128xi1>, vector<8x128xi32>
    %c0_i32_25 = arith.constant 0 : i32
    %80 = vector.broadcast %c0_i32_25 : i32 to vector<8x128xi32>
    %81 = arith.cmpi ne, %79, %80 : vector<8x128xi32>
    %c1_i32_26 = arith.constant 1 : i32
    %82 = tpu.dynamic_rotate %62 by %c1_i32_26 dim 0 : vector<8x128xf32>, i32 -> vector<8x128xf32>
    %cst_27 = arith.constant 0.000000e+00 : f32
    %83 = vector.broadcast %cst_27 : f32 to vector<8x128xf32>
    %84 = arith.select %81, %82, %83 : vector<8x128xi1>, vector<8x128xf32>
    %c16_i32 = arith.constant 16 : i32
    %85 = tpu.dynamic_rotate %61 by %c16_i32 dim 1 : vector<8x128xf32>, i32 -> vector<8x128xf32>
    %86 = arith.addf %84, %85 : vector<8x128xf32>
    %c32_i32 = arith.constant 32 : i32
    %87 = tpu.dynamic_rotate %62 by %c32_i32 dim 1 : vector<8x128xf32>, i32 -> vector<8x128xf32>
    %88 = arith.addf %86, %87 : vector<8x128xf32>
    %89 = arith.truncf %88 : vector<8x128xf32> to vector<8x128xbf16>
    %c0_28 = arith.constant 0 : index
    %c0_29 = arith.constant 0 : index
    %90 = vector.load %arg4[%c0_28, %c0_29] : memref<128x128xbf16, #tpu.memory_space<vmem>>, vector<128x128xbf16>
    %cst_30 = arith.constant dense<0.000000e+00> : vector<8x128xf32>
    %91 = tpu.matmul %89, %90, %cst_30 {dimension_numbers = #tpu.dot_dimension_numbers<[1], [0], [0], [1], [0, 0, 1, 1], [], []>} : vector<8x128xbf16>, vector<128x128xbf16>, vector<8x128xf32> -> vector<8x128xf32>
    %cst_31 = arith.constant dense<0.000000e+00> : vector<128xf32>
    %92 = vector.multi_reduction <add>, %91, %cst_31 [0] : vector<8x128xf32> to vector<128xf32>
    %93 = vector.shape_cast %92 : vector<128xf32> to vector<1x128xf32>
    %cst_32 = arith.constant 1.250000e-01 : f32
    %94 = vector.broadcast %cst_32 : f32 to vector<1x128xf32>
    %95 = arith.mulf %93, %94 : vector<1x128xf32>
    %96 = arith.mulf %91, %91 : vector<8x128xf32>
    %cst_33 = arith.constant dense<0.000000e+00> : vector<128xf32>
    %97 = vector.multi_reduction <add>, %96, %cst_33 [0] : vector<8x128xf32> to vector<128xf32>
    %98 = vector.shape_cast %97 : vector<128xf32> to vector<1x128xf32>
    %cst_34 = arith.constant 1.250000e-01 : f32
    %99 = vector.broadcast %cst_34 : f32 to vector<1x128xf32>
    %100 = arith.mulf %98, %99 : vector<1x128xf32>
    %101 = arith.mulf %95, %95 : vector<1x128xf32>
    %102 = arith.subf %100, %101 : vector<1x128xf32>
    %103 = vector.extract_strided_slice %0 {offsets = [2, 0], sizes = [1, 128], strides = [1, 1]} : vector<4x128xf32> to vector<1x128xf32>
    %cst_35 = arith.constant 9.99999974E-6 : f32
    %104 = vector.broadcast %cst_35 : f32 to vector<1x128xf32>
    %105 = arith.addf %102, %104 : vector<1x128xf32>
    %106 = math.rsqrt %105 : vector<1x128xf32>
    %107 = arith.mulf %103, %106 : vector<1x128xf32>
    %108 = vector.extract_strided_slice %1 {offsets = [2, 0], sizes = [1, 128], strides = [1, 1]} : vector<4x128xf32> to vector<1x128xf32>
    %109 = arith.mulf %95, %107 : vector<1x128xf32>
    %110 = arith.subf %108, %109 : vector<1x128xf32>
    %111 = vector.broadcast %107 : vector<1x128xf32> to vector<8x128xf32>
    %112 = arith.mulf %91, %111 : vector<8x128xf32>
    %113 = vector.broadcast %110 : vector<1x128xf32> to vector<8x128xf32>
    %114 = arith.addf %112, %113 : vector<8x128xf32>
    %cst_36 = arith.constant 0.000000e+00 : f32
    %115 = vector.broadcast %cst_36 : f32 to vector<8x128xf32>
    %116 = arith.maximumf %114, %115 : vector<8x128xf32>
    %117 = arith.truncf %32 : vector<8x128xf32> to vector<8x128xbf16>
    %c0_37 = arith.constant 0 : index
    %c0_38 = arith.constant 0 : index
    %118 = vector.load %arg5[%c0_37, %c0_38] : memref<128x128xbf16, #tpu.memory_space<vmem>>, vector<128x128xbf16>
    %cst_39 = arith.constant dense<0.000000e+00> : vector<8x128xf32>
    %119 = tpu.matmul %117, %118, %cst_39 {dimension_numbers = #tpu.dot_dimension_numbers<[1], [0], [0], [1], [0, 0, 1, 1], [], []>} : vector<8x128xbf16>, vector<128x128xbf16>, vector<8x128xf32> -> vector<8x128xf32>
    %120 = arith.truncf %116 : vector<8x128xf32> to vector<8x128xbf16>
    %c0_40 = arith.constant 0 : index
    %c0_41 = arith.constant 0 : index
    %121 = vector.load %arg6[%c0_40, %c0_41] : memref<128x128xbf16, #tpu.memory_space<vmem>>, vector<128x128xbf16>
    %cst_42 = arith.constant dense<0.000000e+00> : vector<8x128xf32>
    %122 = tpu.matmul %120, %121, %cst_42 {dimension_numbers = #tpu.dot_dimension_numbers<[1], [0], [0], [1], [0, 0, 1, 1], [], []>} : vector<8x128xbf16>, vector<128x128xbf16>, vector<8x128xf32> -> vector<8x128xf32>
    %123 = arith.addf %119, %122 : vector<8x128xf32>
    %cst_43 = arith.constant dense<0.000000e+00> : vector<128xf32>
    %124 = vector.multi_reduction <add>, %123, %cst_43 [0] : vector<8x128xf32> to vector<128xf32>
    %125 = vector.shape_cast %124 : vector<128xf32> to vector<1x128xf32>
    %cst_44 = arith.constant 1.250000e-01 : f32
    %126 = vector.broadcast %cst_44 : f32 to vector<1x128xf32>
    %127 = arith.mulf %125, %126 : vector<1x128xf32>
    %128 = arith.mulf %123, %123 : vector<8x128xf32>
    %cst_45 = arith.constant dense<0.000000e+00> : vector<128xf32>
    %129 = vector.multi_reduction <add>, %128, %cst_45 [0] : vector<8x128xf32> to vector<128xf32>
    %130 = vector.shape_cast %129 : vector<128xf32> to vector<1x128xf32>
    %cst_46 = arith.constant 1.250000e-01 : f32
    %131 = vector.broadcast %cst_46 : f32 to vector<1x128xf32>
    %132 = arith.mulf %130, %131 : vector<1x128xf32>
    %133 = arith.mulf %127, %127 : vector<1x128xf32>
    %134 = arith.subf %132, %133 : vector<1x128xf32>
    %135 = vector.extract_strided_slice %0 {offsets = [3, 0], sizes = [1, 128], strides = [1, 1]} : vector<4x128xf32> to vector<1x128xf32>
    %cst_47 = arith.constant 9.99999974E-6 : f32
    %136 = vector.broadcast %cst_47 : f32 to vector<1x128xf32>
    %137 = arith.addf %134, %136 : vector<1x128xf32>
    %138 = math.rsqrt %137 : vector<1x128xf32>
    %139 = arith.mulf %135, %138 : vector<1x128xf32>
    %140 = vector.extract_strided_slice %1 {offsets = [3, 0], sizes = [1, 128], strides = [1, 1]} : vector<4x128xf32> to vector<1x128xf32>
    %141 = arith.mulf %127, %139 : vector<1x128xf32>
    %142 = arith.subf %140, %141 : vector<1x128xf32>
    %143 = vector.broadcast %139 : vector<1x128xf32> to vector<8x128xf32>
    %144 = arith.mulf %123, %143 : vector<8x128xf32>
    %145 = vector.broadcast %142 : vector<1x128xf32> to vector<8x128xf32>
    %146 = arith.addf %144, %145 : vector<8x128xf32>
    %cst_48 = arith.constant 0.000000e+00 : f32
    %147 = vector.broadcast %cst_48 : f32 to vector<8x128xf32>
    %148 = arith.maximumf %146, %147 : vector<8x128xf32>
    %149 = arith.truncf %148 : vector<8x128xf32> to vector<8x128xbf16>
    %c0_49 = arith.constant 0 : index
    %c0_50 = arith.constant 0 : index
    %150 = vector.load %arg9[%c0_49, %c0_50] : memref<8x128xbf16, #tpu.memory_space<vmem>>, vector<8x128xbf16>
    tpu.vector_store %arg9[%c0_49, %c0_50], %149 {strides = array<i32>} : memref<8x128xbf16, #tpu.memory_space<vmem>>, vector<8x128xbf16>,
    return
  }
  func.func @transform_0(%arg0: i32) -> (i32, i32) {
    %c0_i32 = arith.constant 0 : i32
    %c0_i32_0 = arith.constant 0 : i32
    %c0_i32_1 = arith.constant 0 : i32
    return %c0_i32, %c0_i32_0 : i32, i32
  }
  func.func @transform_1(%arg0: i32) -> (i32, i32) {
    %c0_i32 = arith.constant 0 : i32
    %c0_i32_0 = arith.constant 0 : i32
    %c0_i32_1 = arith.constant 0 : i32
    return %c0_i32, %c0_i32_0 : i32, i32
  }
  func.func @transform_2(%arg0: i32) -> (i32, i32) {
    %c0_i32 = arith.constant 0 : i32
    %c0_i32_0 = arith.constant 0 : i32
    %c0_i32_1 = arith.constant 0 : i32
    return %c0_i32, %c0_i32_0 : i32, i32
  }
  func.func @transform_3(%arg0: i32) -> (i32, i32) {
    %c0_i32 = arith.constant 0 : i32
    %c0_i32_0 = arith.constant 0 : i32
    %c0_i32_1 = arith.constant 0 : i32
    return %c0_i32, %c0_i32_0 : i32, i32
  }
  func.func @transform_4(%arg0: i32) -> (i32, i32) {
    %c0_i32 = arith.constant 0 : i32
    %c0_i32_0 = arith.constant 0 : i32
    %c0_i32_1 = arith.constant 0 : i32
    return %c0_i32, %c0_i32_0 : i32, i32
  }
  func.func @transform_5(%arg0: i32) -> (i32, i32) {
    %c0_i32 = arith.constant 0 : i32
    %c0_i32_0 = arith.constant 0 : i32
    %c0_i32_1 = arith.constant 0 : i32
    return %c0_i32, %c0_i32_0 : i32, i32
  }
  func.func @transform_6(%arg0: i32) -> (i32, i32) {
    %c0_i32 = arith.constant 0 : i32
    %c0_i32_0 = arith.constant 0 : i32
    %c0_i32_1 = arith.constant 0 : i32
    return %c0_i32, %c0_i32_0 : i32, i32
  }
  func.func @transform_7(%arg0: i32) -> (i32, i32) {
    %c0_i32 = arith.constant 0 : i32
    %c0_i32_0 = arith.constant 0 : i32
    %c0_i32_1 = arith.constant 0 : i32
    return %c0_i32, %c0_i32_0 : i32, i32
  }
  func.func @transform_8(%arg0: i32) -> (i32, i32) {
    %c0_i32 = arith.constant 0 : i32
    %c0_i32_0 = arith.constant 0 : i32
    %c0_i32_1 = arith.constant 0 : i32
    return %c0_i32, %c0_i32_0 : i32, i32
  }
}

</mosaic_0001>

<llo_original>
// kernel: stem_block.1
$region0: #{stem_block.1}
  #allocation0 [shape = 'u32[]', space=smem, size = 0x4, offset = 0x4, fixed_abs, tag = 'smem constant byte address 0x4 - core index']
  #allocation1 [shape = 'u32[144,128]{1,0:T(1,128)}', space=vmem, size = 0x12000, scoped, tag = 'internal scratch']
  %s0 = inlined_call_operand.vmem [shape: bf16[16,16], index: 0, kind: input, shape index: {}]
  %s1 = inlined_call_operand.vmem [shape: bf16[16,128], index: 1, kind: input, shape index: {}]
  %s2 = inlined_call_operand.vmem [shape: bf16[128,128], index: 2, kind: input, shape index: {}]
  %s3 = inlined_call_operand.vmem [shape: bf16[128,128], index: 3, kind: input, shape index: {}]
  %s4 = inlined_call_operand.hbm [shape: bf16[128,128], index: 4, kind: input, shape index: {}]
  %s5 = inlined_call_operand.hbm [shape: bf16[128,128], index: 5, kind: input, shape index: {}]
  %s6 = inlined_call_operand.hbm [shape: f32[4,128], index: 6, kind: input, shape index: {}]
  %s7 = inlined_call_operand.hbm [shape: f32[4,128], index: 7, kind: input, shape index: {}]
  %s8 = inlined_call_operand.vmem [shape: bf16[8,128], index: 8, kind: output, shape index: {}]
  %s9 = sld [smem:[#allocation0]]
  $region58: #{stem_block.1} parent=0
    _
  %s11 = ssub.s32 1, %s9
  %s12 = scalar_select 0, %s11, %s9
  $region1: #{stem_block.1} parent=0
    #allocation2 [shape = 'u8[32768]{0}', space=vmem, size = 0x8000, scoped, tag = 'input window, operand 4, single buffered']
    #allocation3 [shape = 's32[1]{0}', space=sflag, size = 0x4, scoped, tag = 'scoped memory for stem_block.1']
    #allocation4 [shape = 'u8[32768]{0}', space=vmem, size = 0x8000, scoped, tag = 'input window, operand 5, single buffered']
    #allocation5 [shape = 's32[1]{0}', space=sflag, size = 0x4, scoped, tag = 'scoped memory for stem_block.1']
    #allocation6 [shape = 'u8[2048]{0}', space=vmem, size = 0x800, scoped, tag = 'input window, operand 6, single buffered']
    #allocation7 [shape = 'u8[2048]{0}', space=vmem, size = 0x800, scoped, tag = 'input window, operand 7, single buffered']
    #allocation8 [shape = 's32[1]{0}', space=sflag, size = 0x4, scoped, tag = 'scoped memory for stem_block.1']
    %13 = vsyncpa [#allocation3], 0
    %14 = vsyncpa [#allocation5], 0
    %15 = vsyncpa [#allocation8], 0
    // Predicated region
    $region2: #{stem_block.1} parent=1 // pred_check
      _
    $region3: #{stem_block.1} parent=1 // pred_check_branch
      %17 = sbr.rel (0) target = $region5
    $region4: #{stem_block.1} parent=1 // pred_region
      _
    $region5: #{stem_block.1} parent=1 // pred_fallthru
      _
    // Predicated region
    $region6: #{stem_block.1} parent=1 // pred_check
      _
    $region7: #{stem_block.1} parent=1 // pred_check_branch
      %19 = sbr.rel (0) target = $region9
    $region8: #{stem_block.1} parent=1 // pred_region
      _
    $region9: #{stem_block.1} parent=1 // pred_fallthru
      _
    // Predicated region
    $region10: #{stem_block.1} parent=1 // pred_check
      _
    $region11: #{stem_block.1} parent=1 // pred_check_branch
      %21 = sbr.rel (0) target = $region13
    $region12: #{stem_block.1} parent=1 // pred_region
      _
    $region13: #{stem_block.1} parent=1 // pred_fallthru
      _
    // Predicated region
    $region14: #{stem_block.1} parent=1 // pred_check
      _
    $region15: #{stem_block.1} parent=1 // pred_check_branch
      %23 = sbr.rel (0) target = $region17
    $region16: #{stem_block.1} parent=1 // pred_region
      _
    $region17: #{stem_block.1} parent=1 // pred_fallthru
      _
    // Predicated region
    $region18: #{stem_block.1} parent=1 // pred_check
      _
    $region19: #{stem_block.1} parent=1 // pred_check_branch
      %25 = sbr.rel (0) target = $region21
    $region20: #{stem_block.1} parent=1 // pred_region
      %s27 = ssub.s32 1024, 1024
      %28 = vsyncadd [#allocation3], %s27
      %s29 = sshll.u32 [#allocation2], 4
      %s30 = int_to_ptr.vmem [resolvable:$true] %s29
      %35 = dma.hbm_to_vmem [thread:$0]  %s4, 1024, %s30, [#allocation3], 64, 64, 4
    $region21: #{stem_block.1} parent=1 // pred_fallthru
      _
    // Predicated region
    $region22: #{stem_block.1} parent=1 // pred_check
      _
    $region23: #{stem_block.1} parent=1 // pred_check_branch
      %37 = sbr.rel (0) target = $region25
    $region24: #{stem_block.1} parent=1 // pred_region
      %s39 = ssub.s32 1024, 1024
      %40 = vsyncadd [#allocation5], %s39
      %s41 = sshll.u32 [#allocation4], 4
      %s42 = int_to_ptr.vmem [resolvable:$true] %s41
      %47 = dma.hbm_to_vmem [thread:$0]  %s5, 1024, %s42, [#allocation5], 64, 64, 4
    $region25: #{stem_block.1} parent=1 // pred_fallthru
      _
    // Predicated region
    $region26: #{stem_block.1} parent=1 // pred_check
      _
    $region27: #{stem_block.1} parent=1 // pred_check_branch
      %49 = sbr.rel (0) target = $region29
    $region28: #{stem_block.1} parent=1 // pred_region
      %s51 = ssub.s32 64, 64
      %52 = vsyncadd [#allocation5], %s51
      %s54 = sshll.u32 [#allocation6], 4
      %s55 = int_to_ptr.vmem [resolvable:$true] %s54
      %57 = dma.hbm_to_vmem [thread:$0]  %s6, 64, %s55, [#allocation5]
    $region29: #{stem_block.1} parent=1 // pred_fallthru
      _
    // Predicated region
    $region30: #{stem_block.1} parent=1 // pred_check
      _
    $region31: #{stem_block.1} parent=1 // pred_check_branch
      %59 = sbr.rel (0) target = $region33
    $region32: #{stem_block.1} parent=1 // pred_region
      %s61 = ssub.s32 64, 64
      %62 = vsyncadd [#allocation8], %s61
      %s64 = sshll.u32 [#allocation7], 4
      %s65 = int_to_ptr.vmem [resolvable:$true] %s64
      %67 = dma.hbm_to_vmem [thread:$0]  %s7, 64, %s65, [#allocation8]
    $region33: #{stem_block.1} parent=1 // pred_fallthru
      _
    // Predicated region
    $region34: #{stem_block.1} parent=1 // pred_check
      _
    $region35: #{stem_block.1} parent=1 // pred_check_branch
      %69 = sbr.rel (0) target = $region37
    $region36: #{stem_block.1} parent=1 // pred_region
      %70 = dma.done [#allocation3], 1024
    $region37: #{stem_block.1} parent=1 // pred_fallthru
      _
    // Predicated region
    $region38: #{stem_block.1} parent=1 // pred_check
      _
    $region39: #{stem_block.1} parent=1 // pred_check_branch
      %72 = sbr.rel (0) target = $region41
    $region40: #{stem_block.1} parent=1 // pred_region
      %73 = dma.done [#allocation5], 1024
    $region41: #{stem_block.1} parent=1 // pred_fallthru
      _
    // Predicated region
    $region42: #{stem_block.1} parent=1 // pred_check
      _
    $region43: #{stem_block.1} parent=1 // pred_check_branch
      %75 = sbr.rel (0) target = $region45
    $region44: #{stem_block.1} parent=1 // pred_region
      %76 = dma.done [#allocation5], 64
    $region45: #{stem_block.1} parent=1 // pred_fallthru
      _
    // Predicated region
    $region46: #{stem_block.1} parent=1 // pred_check
      _
    $region47: #{stem_block.1} parent=1 // pred_check_branch
      %78 = sbr.rel (0) target = $region49
    $region48: #{stem_block.1} parent=1 // pred_region
      %79 = dma.done [#allocation8], 64
    $region49: #{stem_block.1} parent=1 // pred_fallthru
      _
    %v81 = vld [vmem:[#allocation6] sm:$0xf]
    %v82 = vld [vmem:[#allocation7] sm:$0xf]
    %v83 = vld [vmem:[%s0] sm:$0xf]
    %v84 = vld [vmem:[%s0 + $0x4] sm:$0xf]
    %v85 = vld [vmem:[%s1] sm:$0xf]
    %v86 = vld [vmem:[%s1 + $0x4] sm:$0xf]
    %v89 = vunpack.c.l.b16 %v83
    %v90 = vunpack.c.l.b16 %v84
    %v91 = vpack.c.b16 %v90, %v89
    %v94 = vunpack.c.l.b16 %v85
    %v95 = vunpack.c.l.b16 %v86
    %v96 = vpack.c.b16 %v95, %v94
    %vm98 = vcmask 130048
    %v100 = vsel %vm98, %v91, 0
    %102 = vmatprep.subr.bf16.mxu0 0
    %103 = vmatpush1.bf16.msra.mxu0 0
    %104 = vmatprep.subr.bf16.mxu0 0
    %105 = vmatpush1.bf16.msra.mxu0 0
    %106 = vmatprep.subr.bf16.mxu0 0
    %107 = vmatpush1.bf16.msra.mxu0 0
    %108 = vmatprep.subr.bf16.mxu0 0
    %109 = vmatpush1.bf16.msra.mxu0 0
    %110 = vmatprep.subr.bf16.mxu0 0
    %111 = vmatpush1.bf16.msra.mxu0 0
    %112 = vmatprep.subr.bf16.mxu0 0
    %113 = vmatpush1.bf16.msra.mxu0 0
    %114 = vmatprep.subr.bf16.mxu0 0
    %115 = vmatpush1.bf16.msra.mxu0 0
    %116 = vmatprep.subr.bf16.mxu0 0
    %117 = vmatpush1.bf16.msra.mxu0 %v96
    %118 = vmatprep.subr.bf16.mxu0 0
    %119 = vmatpush2.bf16.msra.mxu0 0
    %120 = vmatprep.subr.bf16.mxu0 0
    %121 = vmatpush2.bf16.msra.mxu0 0
    %122 = vmatprep.subr.bf16.mxu0 0
    %123 = vmatpush2.bf16.msra.mxu0 0
    %124 = vmatprep.subr.bf16.mxu0 0
    %125 = vmatpush2.bf16.msra.mxu0 0
    %126 = vmatprep.subr.bf16.mxu0 0
    %127 = vmatpush2.bf16.msra.mxu0 0
    %128 = vmatprep.subr.bf16.mxu0 0
    %129 = vmatpush2.bf16.msra.mxu0 0
    %130 = vmatprep.subr.bf16.mxu0 0
    %131 = vmatpush2.bf16.msra.mxu0 0
    %132 = vmatprep.subr.bf16.mxu0 0
    %133 = vmatpush2.bf16.msra.mxu0 0
    %134 = vmatprep.mubr.bf16.mxu0 0
    %135 = vmatmul.mubr.bf16.gmra.mxu0 %v100
    %v136 = vpop.f32.mrf.mxu0
    %v137 = vadd.f32 0.0, %v136
    %v138 = vpop.f32.mrf.mxu0
    %v139 = vpop.f32.mrf.mxu0
    %v140 = vadd.f32 0.0, %v139
    %v141 = vpop.f32.mrf.mxu0
    %142 = vdwg.mxu0
    %v143 = vadd.f32 %v137, %v140
    %v144 = vrot.slane %v143, 4
    %v145 = vadd.f32 %v143, %v144
    %v146 = vrot.slane %v145, 2
    %v147 = vadd.f32 %v145, %v146
    %v148 = vrot.slane %v147, 1
    %v149 = vadd.f32 %v147, %v148
    %v150 = vmul.f32 %v149, 0.0625
    %v151 = vmul.f32 %v137, %v137
    %v152 = vmul.f32 %v140, %v140
    %v153 = vadd.f32 %v151, %v152
    %v154 = vrot.slane %v153, 4
    %v155 = vadd.f32 %v153, %v154
    %v156 = vrot.slane %v155, 2
    %v157 = vadd.f32 %v155, %v156
    %v158 = vrot.slane %v157, 1
    %v159 = vadd.f32 %v157, %v158
    %v160 = vmul.f32 %v159, 0.0625
    %v161 = vmul.f32 %v150, %v150
    %v162 = vsub.f32 %v160, %v161
    %v163 = vadd.f32 %v162, 1e-05
    %v164 = vrsqrt.pop %v163
    %v165 = vmul.f32 %v81, %v164
    %v166 = vmul.f32 %v150, %v165
    %v167 = vsub.f32 %v82, %v166
    %v168 = vlaneseq
    %v169 = vshrl.u32 %v168, 7
    %v170 = vsub.s32 0, %v169
    %v171 = vrot.slane %v165, %v170
    %v172 = vmul.f32 %v137, %v171
    %v173 = vmul.f32 %v140, %v171
    %v174 = vlaneseq
    %v175 = vshrl.u32 %v174, 7
    %v176 = vsub.s32 0, %v175
    %v177 = vrot.slane %v167, %v176
    %v178 = vadd.f32 %v172, %v177
    %v179 = vadd.f32 %v173, %v177
    %v180 = vmax.f32 %v178, 0.0
    %v181 = vmax.f32 %v179, 0.0
    %v182 = vmax.f32 %v180, %v181
    %v183 = vpack.c.bf16 %v181, %v180
    %v184 = vld [vmem:[%s2] sm:$0xf]
    %v185 = vld [vmem:[%s2 + $0x4] sm:$0xf]
    %v186 = vld [vmem:[%s2 + $0x8] sm:$0xf]
    %v187 = vld [vmem:[%s2 + $0xc] sm:$0xf]
    %v188 = vld [vmem:[%s2 + $0x10] sm:$0xf]
    %v189 = vld [vmem:[%s2 + $0x14] sm:$0xf]
    %v190 = vld [vmem:[%s2 + $0x18] sm:$0xf]
    %v191 = vld [vmem:[%s2 + $0x1c] sm:$0xf]
    %v192 = vld [vmem:[%s2 + $0x20] sm:$0xf]
    %v193 = vld [vmem:[%s2 + $0x24] sm:$0xf]
    %v194 = vld [vmem:[%s2 + $0x28] sm:$0xf]
    %v195 = vld [vmem:[%s2 + $0x2c] sm:$0xf]
    %v196 = vld [vmem:[%s2 + $0x30] sm:$0xf]
    %v197 = vld [vmem:[%s2 + $0x34] sm:$0xf]
    %v198 = vld [vmem:[%s2 + $0x38] sm:$0xf]
    %v199 = vld [vmem:[%s2 + $0x3c] sm:$0xf]
    %v216 = vunpack.c.l.b16 %v184
    %v217 = vunpack.c.l.b16 %v185
    %v218 = vunpack.c.l.b16 %v186
    %v219 = vunpack.c.l.b16 %v187
    %v220 = vunpack.c.l.b16 %v188
    %v221 = vunpack.c.l.b16 %v189
    %v222 = vunpack.c.l.b16 %v190
    %v223 = vunpack.c.l.b16 %v191
    %v224 = vunpack.c.l.b16 %v192
    %v225 = vunpack.c.l.b16 %v193
    %v226 = vunpack.c.l.b16 %v194
    %v227 = vunpack.c.l.b16 %v195
    %v228 = vunpack.c.l.b16 %v196
    %v229 = vunpack.c.l.b16 %v197
    %v230 = vunpack.c.l.b16 %v198
    %v231 = vunpack.c.l.b16 %v199
    %v232 = vpack.c.b16 %v217, %v216
    %v233 = vpack.c.b16 %v219, %v218
    %v234 = vpack.c.b16 %v221, %v220
    %v235 = vpack.c.b16 %v223, %v222
    %v236 = vpack.c.b16 %v225, %v224
    %v237 = vpack.c.b16 %v227, %v226
    %v238 = vpack.c.b16 %v229, %v228
    %v239 = vpack.c.b16 %v231, %v230
    %248 = vmatprep.subr.bf16.mxu0 0
    %249 = vmatpush1.bf16.msra.mxu0 %v239
    %250 = vmatprep.subr.bf16.mxu0 0
    %251 = vmatpush1.bf16.msra.mxu0 %v238
    %252 = vmatprep.subr.bf16.mxu0 0
    %253 = vmatpush1.bf16.msra.mxu0 %v237
    %254 = vmatprep.subr.bf16.mxu0 0
    %255 = vmatpush1.bf16.msra.mxu0 %v236
    %256 = vmatprep.subr.bf16.mxu0 0
    %257 = vmatpush1.bf16.msra.mxu0 %v235
    %258 = vmatprep.subr.bf16.mxu0 0
    %259 = vmatpush1.bf16.msra.mxu0 %v234
    %260 = vmatprep.subr.bf16.mxu0 0
    %261 = vmatpush1.bf16.msra.mxu0 %v233
    %262 = vmatprep.subr.bf16.mxu0 0
    %263 = vmatpush1.bf16.msra.mxu0 %v232
    %264 = vmatprep.subr.bf16.mxu0 0
    %265 = vmatpush2.bf16.msra.mxu0 0
    %266 = vmatprep.subr.bf16.mxu0 0
    %267 = vmatpush2.bf16.msra.mxu0 0
    %268 = vmatprep.subr.bf16.mxu0 0
    %269 = vmatpush2.bf16.msra.mxu0 0
    %270 = vmatprep.subr.bf16.mxu0 0
    %271 = vmatpush2.bf16.msra.mxu0 0
    %272 = vmatprep.subr.bf16.mxu0 0
    %273 = vmatpush2.bf16.msra.mxu0 0
    %274 = vmatprep.subr.bf16.mxu0 0
    %275 = vmatpush2.bf16.msra.mxu0 0
    %276 = vmatprep.subr.bf16.mxu0 0
    %277 = vmatpush2.bf16.msra.mxu0 0
    %278 = vmatprep.subr.bf16.mxu0 0
    %279 = vmatpush2.bf16.msra.mxu0 0
    %280 = vmatprep.mubr.bf16.mxu0 0
    %281 = vmatmul.mubr.bf16.gmra.mxu0 %v183
    %v282 = vpop.f32.mrf.mxu0
    %v283 = vadd.f32 0.0, %v282
    %v284 = vpop.f32.mrf.mxu0
    %v285 = vpop.f32.mrf.mxu0
    %v286 = vadd.f32 0.0, %v285
    %v287 = vpop.f32.mrf.mxu0
    %288 = vdwg.mxu0
    %v289 = vadd.f32 %v283, %v286
    %v290 = vrot.slane %v289, 4
    %v291 = vadd.f32 %v289, %v290
    %v292 = vrot.slane %v291, 2
    %v293 = vadd.f32 %v291, %v292
    %v294 = vrot.slane %v293, 1
    %v295 = vadd.f32 %v293, %v294
    %v296 = vmul.f32 %v295, 0.0625
    %v297 = vmul.f32 %v283, %v283
    %v298 = vmul.f32 %v286, %v286
    %v299 = vadd.f32 %v297, %v298
    %v300 = vrot.slane %v299, 4
    %v301 = vadd.f32 %v299, %v300
    %v302 = vrot.slane %v301, 2
    %v303 = vadd.f32 %v301, %v302
    %v304 = vrot.slane %v303, 1
    %v305 = vadd.f32 %v303, %v304
    %v306 = vmul.f32 %v305, 0.0625
    %v307 = vmul.f32 %v296, %v296
    %v308 = vsub.f32 %v306, %v307
    %v309 = vadd.f32 %v308, 1e-05
    %v310 = vrsqrt.pop %v309
    %v311 = vmul.f32 %v81, %v310
    %v312 = vmul.f32 %v296, %v311
    %v313 = vsub.f32 %v82, %v312
    %v314 = vlaneseq
    %v315 = vshrl.u32 %v314, 7
    %v316 = vsub.s32 1, %v315
    %v317 = vrot.slane %v311, %v316
    %v318 = vmul.f32 %v283, %v317
    %v319 = vmul.f32 %v286, %v317
    %v320 = vlaneseq
    %v321 = vshrl.u32 %v320, 7
    %v322 = vsub.s32 1, %v321
    %v323 = vrot.slane %v313, %v322
    %v324 = vadd.f32 %v318, %v323
    %v325 = vadd.f32 %v319, %v323
    %v326 = vmax.f32 %v324, 0.0
    %v327 = vmax.f32 %v325, 0.0
    %v328 = vlaneseq
    %v329 = vshrl.u32 %v328, 7
    %vm330 = vcmp.lt.s32.totalorder %v329, 0
    %v331 = vsub.s32 0, %v329
    %v332 = vsel %vm330, %v331, %v329
    %v333 = vshrl.u32 %v332, 2
    %v334 = vand.u32 %v332, 3
    %v335 = vsub.s32 0, %v334
    %v336 = vsel %vm330, %v335, %v334
    %vm337 = vcmp.ne.s32.totalorder %v336, 0
    %vm338 = vcmp.lt.s32.totalorder %v336, 0
    %vm339 = vmand %vm338, %vm337
    %v340 = vadd.s32 %v336, 4
    %v341 = vsel %vm339, %v340, %v336
    %vm342 = vcmp.ne.s32.totalorder %v341, 0
    %v343 = vrot.slane %v327, 7
    %v344 = vsel %vm342, %v343, 0.0
    %345 = vrot.lane.b32.xlu0 %v326, 16
    %v346 = vpop.permute.xlu0 %345
    %v347 = vadd.f32 %v344, %v346
    %348 = vrot.lane.b32.xlu0 %v327, 32
    %v349 = vpop.permute.xlu0 %348
    %v350 = vadd.f32 %v347, %v349
    %v351 = vpack.c.bf16 %v350, %v350
    %v352 = vld [vmem:[%s3] sm:$0xf]
    %v353 = vld [vmem:[%s3 + $0x4] sm:$0xf]
    %v354 = vld [vmem:[%s3 + $0x8] sm:$0xf]
    %v355 = vld [vmem:[%s3 + $0xc] sm:$0xf]
    %v356 = vld [vmem:[%s3 + $0x10] sm:$0xf]
    %v357 = vld [vmem:[%s3 + $0x14] sm:$0xf]
    %v358 = vld [vmem:[%s3 + $0x18] sm:$0xf]
    %v359 = vld [vmem:[%s3 + $0x1c] sm:$0xf]
    %v360 = vld [vmem:[%s3 + $0x20] sm:$0xf]
    %v361 = vld [vmem:[%s3 + $0x24] sm:$0xf]
    %v362 = vld [vmem:[%s3 + $0x28] sm:$0xf]
    %v363 = vld [vmem:[%s3 + $0x2c] sm:$0xf]
    %v364 = vld [vmem:[%s3 + $0x30] sm:$0xf]
    %v365 = vld [vmem:[%s3 + $0x34] sm:$0xf]
    %v366 = vld [vmem:[%s3 + $0x38] sm:$0xf]
    %v367 = vld [vmem:[%s3 + $0x3c] sm:$0xf]
    %v384 = vunpack.c.l.b16 %v352
    %v385 = vunpack.c.l.b16 %v353
    %v386 = vunpack.c.l.b16 %v354
    %v387 = vunpack.c.l.b16 %v355
    %v388 = vunpack.c.l.b16 %v356
    %v389 = vunpack.c.l.b16 %v357
    %v390 = vunpack.c.l.b16 %v358
    %v391 = vunpack.c.l.b16 %v359
    %v392 = vunpack.c.l.b16 %v360
    %v393 = vunpack.c.l.b16 %v361
    %v394 = vunpack.c.l.b16 %v362
    %v395 = vunpack.c.l.b16 %v363
    %v396 = vunpack.c.l.b16 %v364
    %v397 = vunpack.c.l.b16 %v365
    %v398 = vunpack.c.l.b16 %v366
    %v399 = vunpack.c.l.b16 %v367
    %v400 = vpack.c.b16 %v385, %v384
    %v401 = vpack.c.b16 %v387, %v386
    %v402 = vpack.c.b16 %v389, %v388
    %v403 = vpack.c.b16 %v391, %v390
    %v404 = vpack.c.b16 %v393, %v392
    %v405 = vpack.c.b16 %v395, %v394
    %v406 = vpack.c.b16 %v397, %v396
    %v407 = vpack.c.b16 %v399, %v398
    %416 = vmatprep.subr.bf16.mxu0 0
    %417 = vmatpush1.bf16.msra.mxu0 %v407
    %418 = vmatprep.subr.bf16.mxu0 0
    %419 = vmatpush1.bf16.msra.mxu0 %v406
    %420 = vmatprep.subr.bf16.mxu0 0
    %421 = vmatpush1.bf16.msra.mxu0 %v405
    %422 = vmatprep.subr.bf16.mxu0 0
    %423 = vmatpush1.bf16.msra.mxu0 %v404
    %424 = vmatprep.subr.bf16.mxu0 0
    %425 = vmatpush1.bf16.msra.mxu0 %v403
    %426 = vmatprep.subr.bf16.mxu0 0
    %427 = vmatpush1.bf16.msra.mxu0 %v402
    %428 = vmatprep.subr.bf16.mxu0 0
    %429 = vmatpush1.bf16.msra.mxu0 %v401
    %430 = vmatprep.subr.bf16.mxu0 0
    %431 = vmatpush1.bf16.msra.mxu0 %v400
    %432 = vmatprep.subr.bf16.mxu0 0
    %433 = vmatpush2.bf16.msra.mxu0 0
    %434 = vmatprep.subr.bf16.mxu0 0
    %435 = vmatpush2.bf16.msra.mxu0 0
    %436 = vmatprep.subr.bf16.mxu0 0
    %437 = vmatpush2.bf16.msra.mxu0 0
    %438 = vmatprep.subr.bf16.mxu0 0
    %439 = vmatpush2.bf16.msra.mxu0 0
    %440 = vmatprep.subr.bf16.mxu0 0
    %441 = vmatpush2.bf16.msra.mxu0 0
    %442 = vmatprep.subr.bf16.mxu0 0
    %443 = vmatpush2.bf16.msra.mxu0 0
    %444 = vmatprep.subr.bf16.mxu0 0
    %445 = vmatpush2.bf16.msra.mxu0 0
    %446 = vmatprep.subr.bf16.mxu0 0
    %447 = vmatpush2.bf16.msra.mxu0 0
    %448 = vmatprep.mubr.bf16.mxu0 0
    %449 = vmatmul.mubr.bf16.gmra.mxu0 %v351
    %v450 = vpop.f32.mrf.mxu0
    %v451 = vadd.f32 0.0, %v450
    %v452 = vpop.f32.mrf.mxu0
    %v453 = vpop.f32.mrf.mxu0
    %v454 = vpop.f32.mrf.mxu0
    %455 = vdwg.mxu0
    %v456 = vrot.slane %v451, 4
    %v457 = vadd.f32 %v451, %v456
    %v458 = vrot.slane %v457, 2
    %v459 = vadd.f32 %v457, %v458
    %v460 = vrot.slane %v459, 1
    %v461 = vadd.f32 %v459, %v460
    %v462 = vmul.f32 %v461, 0.125
    %v463 = vmul.f32 %v451, %v451
    %v464 = vrot.slane %v463, 4
    %v465 = vadd.f32 %v463, %v464
    %v466 = vrot.slane %v465, 2
    %v467 = vadd.f32 %v465, %v466
    %v468 = vrot.slane %v467, 1
    %v469 = vadd.f32 %v467, %v468
    %v470 = vmul.f32 %v469, 0.125
    %v471 = vmul.f32 %v462, %v462
    %v472 = vsub.f32 %v470, %v471
    %v473 = vadd.f32 %v472, 1e-05
    %v474 = vrsqrt.pop %v473
    %v475 = vmul.f32 %v81, %v474
    %v476 = vmul.f32 %v462, %v475
    %v477 = vsub.f32 %v82, %v476
    %v478 = vlaneseq
    %v479 = vshrl.u32 %v478, 7
    %v480 = vsub.s32 2, %v479
    %v481 = vrot.slane %v475, %v480
    %v482 = vmul.f32 %v451, %v481
    %v483 = vlaneseq
    %v484 = vshrl.u32 %v483, 7
    %v485 = vsub.s32 2, %v484
    %v486 = vrot.slane %v477, %v485
    %v487 = vadd.f32 %v482, %v486
    %v488 = vmax.f32 %v487, 0.0
    %v489 = vpack.c.bf16 %v182, %v182
    %v490 = vld [vmem:[#allocation2] sm:$0xf]
    %v491 = vld [vmem:[#allocation2 + $0x4] sm:$0xf]
    %v492 = vld [vmem:[#allocation2 + $0x8] sm:$0xf]
    %v493 = vld [vmem:[#allocation2 + $0xc] sm:$0xf]
    %v494 = vld [vmem:[#allocation2 + $0x10] sm:$0xf]
    %v495 = vld [vmem:[#allocation2 + $0x14] sm:$0xf]
    %v496 = vld [vmem:[#allocation2 + $0x18] sm:$0xf]
    %v497 = vld [vmem:[#allocation2 + $0x1c] sm:$0xf]
    %v498 = vld [vmem:[#allocation2 + $0x20] sm:$0xf]
    %v499 = vld [vmem:[#allocation2 + $0x24] sm:$0xf]
    %v500 = vld [vmem:[#allocation2 + $0x28] sm:$0xf]
    %v501 = vld [vmem:[#allocation2 + $0x2c] sm:$0xf]
    %v502 = vld [vmem:[#allocation2 + $0x30] sm:$0xf]
    %v503 = vld [vmem:[#allocation2 + $0x34] sm:$0xf]
    %v504 = vld [vmem:[#allocation2 + $0x38] sm:$0xf]
    %v505 = vld [vmem:[#allocation2 + $0x3c] sm:$0xf]
    %v506 = vpack.c.bf16 %v488, %v488
    %v507 = vld [vmem:[#allocation4] sm:$0xf]
    %v508 = vld [vmem:[#allocation4 + $0x4] sm:$0xf]
    %v509 = vld [vmem:[#allocation4 + $0x8] sm:$0xf]
    %v510 = vld [vmem:[#allocation4 + $0xc] sm:$0xf]
    %v511 = vld [vmem:[#allocation4 + $0x10] sm:$0xf]
    %v512 = vld [vmem:[#allocation4 + $0x14] sm:$0xf]
    %v513 = vld [vmem:[#allocation4 + $0x18] sm:$0xf]
    %v514 = vld [vmem:[#allocation4 + $0x1c] sm:$0xf]
    %v515 = vld [vmem:[#allocation4 + $0x20] sm:$0xf]
    %v516 = vld [vmem:[#allocation4 + $0x24] sm:$0xf]
    %v517 = vld [vmem:[#allocation4 + $0x28] sm:$0xf]
    %v518 = vld [vmem:[#allocation4 + $0x2c] sm:$0xf]
    %v519 = vld [vmem:[#allocation4 + $0x30] sm:$0xf]
    %v520 = vld [vmem:[#allocation4 + $0x34] sm:$0xf]
    %v521 = vld [vmem:[#allocation4 + $0x38] sm:$0xf]
    %v522 = vld [vmem:[#allocation4 + $0x3c] sm:$0xf]
    %v539 = vunpack.c.l.b16 %v507
    %v540 = vunpack.c.l.b16 %v508
    %v541 = vunpack.c.l.b16 %v509
    %v542 = vunpack.c.l.b16 %v510
    %v543 = vunpack.c.l.b16 %v511
    %v544 = vunpack.c.l.b16 %v512
    %v545 = vunpack.c.l.b16 %v513
    %v546 = vunpack.c.l.b16 %v514
    %v547 = vunpack.c.l.b16 %v515
    %v548 = vunpack.c.l.b16 %v516
    %v549 = vunpack.c.l.b16 %v517
    %v550 = vunpack.c.l.b16 %v518
    %v551 = vunpack.c.l.b16 %v519
    %v552 = vunpack.c.l.b16 %v520
    %v553 = vunpack.c.l.b16 %v521
    %v554 = vunpack.c.l.b16 %v522
    %v555 = vpack.c.b16 %v540, %v539
    %v556 = vpack.c.b16 %v542, %v541
    %v557 = vpack.c.b16 %v544, %v543
    %v558 = vpack.c.b16 %v546, %v545
    %v559 = vpack.c.b16 %v548, %v547
    %v560 = vpack.c.b16 %v550, %v549
    %v561 = vpack.c.b16 %v552, %v551
    %v562 = vpack.c.b16 %v554, %v553
    %571 = vmatprep.subr.bf16.mxu0 0
    %572 = vmatpush1.bf16.msra.mxu0 %v562
    %573 = vmatprep.subr.bf16.mxu0 0
    %574 = vmatpush1.bf16.msra.mxu0 %v561
    %575 = vmatprep.subr.bf16.mxu0 0
    %576 = vmatpush1.bf16.msra.mxu0 %v560
    %577 = vmatprep.subr.bf16.mxu0 0
    %578 = vmatpush1.bf16.msra.mxu0 %v559
    %579 = vmatprep.subr.bf16.mxu0 0
    %580 = vmatpush1.bf16.msra.mxu0 %v558
    %581 = vmatprep.subr.bf16.mxu0 0
    %582 = vmatpush1.bf16.msra.mxu0 %v557
    %583 = vmatprep.subr.bf16.mxu0 0
    %584 = vmatpush1.bf16.msra.mxu0 %v556
    %585 = vmatprep.subr.bf16.mxu0 0
    %586 = vmatpush1.bf16.msra.mxu0 %v555
    %587 = vmatprep.subr.bf16.mxu0 0
    %588 = vmatpush2.bf16.msra.mxu0 0
    %589 = vmatprep.subr.bf16.mxu0 0
    %590 = vmatpush2.bf16.msra.mxu0 0
    %591 = vmatprep.subr.bf16.mxu0 0
    %592 = vmatpush2.bf16.msra.mxu0 0
    %593 = vmatprep.subr.bf16.mxu0 0
    %594 = vmatpush2.bf16.msra.mxu0 0
    %595 = vmatprep.subr.bf16.mxu0 0
    %596 = vmatpush2.bf16.msra.mxu0 0
    %597 = vmatprep.subr.bf16.mxu0 0
    %598 = vmatpush2.bf16.msra.mxu0 0
    %599 = vmatprep.subr.bf16.mxu0 0
    %600 = vmatpush2.bf16.msra.mxu0 0
    %601 = vmatprep.subr.bf16.mxu0 0
    %602 = vmatpush2.bf16.msra.mxu0 0
    %603 = vmatprep.mubr.bf16.mxu0 0
    %604 = vmatmul.mubr.bf16.gmra.mxu0 %v506
    %v605 = vpop.f32.mrf.mxu0
    %v606 = vadd.f32 0.0, %v605
    %v607 = vpop.f32.mrf.mxu0
    %v608 = vpop.f32.mrf.mxu0
    %v609 = vpop.f32.mrf.mxu0
    %610 = vdwg.mxu0
    %v627 = vunpack.c.l.b16 %v490
    %v628 = vunpack.c.l.b16 %v491
    %v629 = vunpack.c.l.b16 %v492
    %v630 = vunpack.c.l.b16 %v493
    %v631 = vunpack.c.l.b16 %v494
    %v632 = vunpack.c.l.b16 %v495
    %v633 = vunpack.c.l.b16 %v496
    %v634 = vunpack.c.l.b16 %v497
    %v635 = vunpack.c.l.b16 %v498
    %v636 = vunpack.c.l.b16 %v499
    %v637 = vunpack.c.l.b16 %v500
    %v638 = vunpack.c.l.b16 %v501
    %v639 = vunpack.c.l.b16 %v502
    %v640 = vunpack.c.l.b16 %v503
    %v641 = vunpack.c.l.b16 %v504
    %v642 = vunpack.c.l.b16 %v505
    %v643 = vpack.c.b16 %v628, %v627
    %v644 = vpack.c.b16 %v630, %v629
    %v645 = vpack.c.b16 %v632, %v631
    %v646 = vpack.c.b16 %v634, %v633
    %v647 = vpack.c.b16 %v636, %v635
    %v648 = vpack.c.b16 %v638, %v637
    %v649 = vpack.c.b16 %v640, %v639
    %v650 = vpack.c.b16 %v642, %v641
    %659 = vmatprep.subr.bf16.mxu0 0
    %660 = vmatpush1.bf16.msra.mxu0 %v650
    %661 = vmatprep.subr.bf16.mxu0 0
    %662 = vmatpush1.bf16.msra.mxu0 %v649
    %663 = vmatprep.subr.bf16.mxu0 0
    %664 = vmatpush1.bf16.msra.mxu0 %v648
    %665 = vmatprep.subr.bf16.mxu0 0
    %666 = vmatpush1.bf16.msra.mxu0 %v647
    %667 = vmatprep.subr.bf16.mxu0 0
    %668 = vmatpush1.bf16.msra.mxu0 %v646
    %669 = vmatprep.subr.bf16.mxu0 0
    %670 = vmatpush1.bf16.msra.mxu0 %v645
    %671 = vmatprep.subr.bf16.mxu0 0
    %672 = vmatpush1.bf16.msra.mxu0 %v644
    %673 = vmatprep.subr.bf16.mxu0 0
    %674 = vmatpush1.bf16.msra.mxu0 %v643
    %675 = vmatprep.subr.bf16.mxu0 0
    %676 = vmatpush2.bf16.msra.mxu0 0
    %677 = vmatprep.subr.bf16.mxu0 0
    %678 = vmatpush2.bf16.msra.mxu0 0
    %679 = vmatprep.subr.bf16.mxu0 0
    %680 = vmatpush2.bf16.msra.mxu0 0
    %681 = vmatprep.subr.bf16.mxu0 0
    %682 = vmatpush2.bf16.msra.mxu0 0
    %683 = vmatprep.subr.bf16.mxu0 0
    %684 = vmatpush2.bf16.msra.mxu0 0
    %685 = vmatprep.subr.bf16.mxu0 0
    %686 = vmatpush2.bf16.msra.mxu0 0
    %687 = vmatprep.subr.bf16.mxu0 0
    %688 = vmatpush2.bf16.msra.mxu0 0
    %689 = vmatprep.subr.bf16.mxu0 0
    %690 = vmatpush2.bf16.msra.mxu0 0
    %691 = vmatprep.mubr.bf16.mxu0 0
    %692 = vmatmul.mubr.bf16.gmra.mxu0 %v489
    %v693 = vpop.f32.mrf.mxu0
    %v694 = vadd.f32 %v606, %v693
    %v695 = vpop.f32.mrf.mxu0
    %v696 = vpop.f32.mrf.mxu0
    %v697 = vpop.f32.mrf.mxu0
    %698 = vdwg.mxu0
    %v699 = vrot.slane %v694, 4
    %v700 = vadd.f32 %v694, %v699
    %v701 = vrot.slane %v700, 2
    %v702 = vadd.f32 %v700, %v701
    %v703 = vrot.slane %v702, 1
    %v704 = vadd.f32 %v702, %v703
    %v705 = vmul.f32 %v704, 0.125
    %v706 = vmul.f32 %v694, %v694
    %v707 = vrot.slane %v706, 4
    %v708 = vadd.f32 %v706, %v707
    %v709 = vrot.slane %v708, 2
    %v710 = vadd.f32 %v708, %v709
    %v711 = vrot.slane %v710, 1
    %v712 = vadd.f32 %v710, %v711
    %v713 = vmul.f32 %v712, 0.125
    %v714 = vmul.f32 %v705, %v705
    %v715 = vsub.f32 %v713, %v714
    %v716 = vadd.f32 %v715, 1e-05
    %v717 = vrsqrt.pop %v716
    %v718 = vmul.f32 %v81, %v717
    %v719 = vmul.f32 %v705, %v718
    %v720 = vsub.f32 %v82, %v719
    %v721 = vlaneseq
    %v722 = vshrl.u32 %v721, 7
    %v723 = vsub.s32 3, %v722
    %v724 = vrot.slane %v718, %v723
    %v725 = vmul.f32 %v694, %v724
    %v726 = vlaneseq
    %v727 = vshrl.u32 %v726, 7
    %v728 = vsub.s32 3, %v727
    %v729 = vrot.slane %v720, %v728
    %v730 = vadd.f32 %v725, %v729
    %v731 = vmax.f32 %v730, 0.0
    %v732 = vpack.c.bf16 %v731, %v731
    %733 = vst [vmem:[%s8] sm:$0xf] %v732
    // Predicated region
    $region50: #{stem_block.1} parent=1 // pred_check
      _
    $region51: #{stem_block.1} parent=1 // pred_check_branch
      %735 = sbr.rel (0) target = $region53
    $region52: #{stem_block.1} parent=1 // pred_region
      _
    $region53: #{stem_block.1} parent=1 // pred_fallthru
      _
    // Predicated region
    $region54: #{stem_block.1} parent=1 // pred_check
      _
    $region55: #{stem_block.1} parent=1 // pred_check_branch
      %737 = sbr.rel (0) target = $region57
    $region56: #{stem_block.1} parent=1 // pred_region
      _
    $region57: #{stem_block.1} parent=1 // pred_fallthru
      _
    %738 = vsyncpa [#allocation3], 1
    %739 = vsyncpa [#allocation5], 1
    %740 = vsyncpa [#allocation8], 1

</llo_original>
